<compile_context>
chip_gen: v6e
topology: v6e:2x2x1
jax: 0.10.0
libtpu: 0.0.40
codegen_flags: <defaults>
</compile_context>

<pallas_src>
import jax
import jax.numpy as jnp
from jax.experimental import pallas as pl
from jax.experimental.pallas import tpu as pltpu


def _round_up(x, m):
    return ((x + m - 1) // m) * m


def _decoder_kernel(embh_ref, enc_ref, c_ref, mask_ref,
                    w1eh_ref, w1e_ref, b1_ref, w2_ref, b2_ref,
                    wlstm_ctx_ref, wlstm_eh_ref, bg_ref,
                    wfc_h_ref, wfc_ctx_ref, bfc_ref,
                    out_ref):
    embh = embh_ref[...]                 # (TB, E+H)   bf16 (matmul operand dtype)
    enc_flat = enc_ref[...]              # (TB*S, 2H)  bf16, flattened in the wrapper
    c = c_ref[...]                       # (TB, H)     f32
    mask = mask_ref[...]                 # (TB, S)     f32 (0/1)

    TB, H = c.shape
    S = mask.shape[1]
    H2 = enc_flat.shape[1]
    mm_dtype = enc_flat.dtype

    # --- attention energy MLP: Linear(3H->H) -> ReLU -> Linear(H->1)
    # cat((h_rep, enc)) @ W1 == enc @ W1_enc + h @ W1_h ; the hidden part comes from the
    # [emb|h] input through a weight whose emb rows are zero (no lane-offset slice, and
    # h @ W1_h is computed once per row instead of once per (row, position)).
    e_h = jnp.dot(embh, w1eh_ref[...], preferred_element_type=jnp.float32)      # (TB, H)
    e_e = jnp.dot(enc_flat, w1e_ref[...], preferred_element_type=jnp.float32)   # (TB*S, H)
    e1 = jnp.maximum(e_e.reshape(TB, S, H) + e_h[:, None, :]
                     + b1_ref[...][:, None, :], 0.0)                            # (TB, S, H)
    energy = jnp.sum(e1 * w2_ref[...][:, None, :], axis=-1) + b2_ref[...]       # (TB, S)
    energy = jnp.where(mask > 0.0, energy, jnp.float32(-1e37))

    # --- softmax over the sequence axis (torch dim=1); divide on the EUP (approx recip).
    m = jnp.max(energy, axis=1, keepdims=True)
    p = jnp.exp(energy - m)
    attn = p * pl.reciprocal(jnp.sum(p, axis=1, keepdims=True), approx=True)    # (TB, S)

    # --- context vector: einsum('nsk,nsl->nkl') with k==1 -> (TB, 2H), f32.
    # Reshape is tile-aligned when S % 8 == 0.
    enc3 = enc_flat.astype(jnp.float32).reshape(TB, S, H2)
    ctx = jnp.sum(attn[:, :, None] * enc3, axis=1)                              # (TB, 2H)

    # --- single LSTM step, PyTorch gate order (i, f, g, o).
    # Split matmuls (ctx / [emb|h]) instead of an in-kernel concat slab: no partial stores.
    ctx_b = ctx.astype(mm_dtype)
    gates = (jnp.dot(ctx_b, wlstm_ctx_ref[...], preferred_element_type=jnp.float32)
             + jnp.dot(embh, wlstm_eh_ref[...], preferred_element_type=jnp.float32)
             + bg_ref[...])                                                     # (TB, 4H)
    i_g = jax.nn.sigmoid(gates[:, 0 * H:1 * H])
    f_g = jax.nn.sigmoid(gates[:, 1 * H:2 * H])
    g_g = jnp.tanh(gates[:, 2 * H:3 * H])
    o_g = jax.nn.sigmoid(gates[:, 3 * H:4 * H])
    c_new = f_g * c + i_g * g_g
    h_new = o_g * jnp.tanh(c_new)

    # --- fc on cat([lstm_output, context_vector], -1), again as split matmuls.
    pred = (jnp.dot(h_new.astype(mm_dtype), wfc_h_ref[...],
                    preferred_element_type=jnp.float32)
            + jnp.dot(ctx_b, wfc_ctx_ref[...], preferred_element_type=jnp.float32)
            + bfc_ref[...])                                                     # (TB, O)

    # One lane-dense output slab written once: [pred | h_new | c_new].
    out_ref[...] = jnp.concatenate([pred, h_new, c_new], axis=-1)


def decoder_forward(params, x_tok, encoder_states, hidden, cell, attention_mask=None):
    """Pallas version of Decoder.forward. Returns (predictions, hidden, cell)."""
    # Embedding gather (tiny) done in plain JAX.
    emb = params["embedding"][x_tok].astype(jnp.float32)          # (N, E)
    N, S, H2 = encoder_states.shape
    H = hidden.shape[-1]
    E = emb.shape[-1]
    O = params["bfc"].shape[-1]
    mm_dtype = params["w1e"].dtype                                # matmul operand dtype

    if attention_mask is None:
        mask = jnp.ones((N, S), jnp.float32)
    else:
        mask = jnp.asarray(attention_mask, bool).astype(jnp.float32)

    # Batch tile: sublane-aligned; MXU-row-friendly (up to 128) for large batches; aims
    # for >=2 grid steps when the batch allows so both v7x TensorCores get work.
    n8 = _round_up(N, 8)
    if n8 <= 8:
        TB = n8
    elif n8 >= 256:
        TB = 128
    else:
        TB = _round_up((n8 + 1) // 2, 8)
    N_pad = _round_up(N, TB)
    pad = N_pad - N

    def pad_rows(a):
        return jnp.pad(a, ((0, pad),) + ((0, 0),) * (a.ndim - 1)) if pad else a

    # [emb | h] pre-concatenated in the wrapper (free XLA layout op); bf16 for the MXU.
    embh_p = pad_rows(jnp.concatenate(
        [emb, hidden[0].astype(jnp.float32)], axis=1)).astype(mm_dtype)          # (N_pad, E+H)
    enc_p = pad_rows(encoder_states.astype(mm_dtype)).reshape(N_pad * S, H2)     # (N_pad*S, 2H)
    c_p = pad_rows(cell[0].astype(jnp.float32))                                  # (N_pad, H)
    mask_p = pad_rows(mask)                                                      # (N_pad, S)

    grid = (N_pad // TB,)

    def bspec(shape_tail):
        nt = len(shape_tail)
        return pl.BlockSpec((TB,) + shape_tail, lambda i, _nt=nt: (i,) + (0,) * _nt)

    def wspec(arr):
        nd = arr.ndim
        return pl.BlockSpec(arr.shape, lambda i, _nd=nd: (0,) * _nd)

    weight_names = ("w1eh", "w1e", "b1", "w2", "b2",
                    "w_lstm_ctx", "w_lstm_eh", "bg",
                    "w_fc_h", "w_fc_ctx", "bfc")
    weights = [params[k] for k in weight_names]

    in_specs = ([bspec((E + H,)),                                  # embh
                 pl.BlockSpec((TB * S, H2), lambda i: (i, 0)),     # enc (flat)
                 bspec((H,)),                                      # c
                 bspec((S,))]                                      # mask
                + [wspec(w) for w in weights])

    out = pl.pallas_call(
        _decoder_kernel,
        grid=grid,
        in_specs=in_specs,
        out_specs=pl.BlockSpec((TB, O + 2 * H), lambda i: (i, 0)),
        out_shape=jax.ShapeDtypeStruct((N_pad, O + 2 * H), jnp.float32),
        compiler_params=pltpu.CompilerParams(
            dimension_semantics=("parallel",)),
    )(embh_p, enc_p, c_p, mask_p, *weights)

    pred = out[:N, :O]
    h_new = out[:N, O:O + H][None]
    c_new = out[:N, O + H:][None]
    return pred, h_new, c_new


def init_params(key, input_size, embedding_size, hidden_size, output_size,
                matmul_dtype=jnp.bfloat16):
    """Deterministic synthetic parameters, shapes matching the PyTorch module
    (num_layers=1), pre-split/transposed into the kernel's matmul layouts."""
    H, E, O = hidden_size, embedding_size, output_size
    ks = jax.random.split(key, 11)

    def u(k, shape, scale):
        return jax.random.uniform(k, shape, jnp.float32, -scale, scale)

    embedding = jax.random.normal(ks[0], (input_size, E), jnp.float32) * 0.1

    s1 = 1.0 / (3 * H) ** 0.5                      # energy[0]: Linear(3H, H)
    W1 = u(ks[1], (H, 3 * H), s1)
    b1 = u(ks[2], (H,), s1)

    s2 = 1.0 / H ** 0.5                            # energy[2]: Linear(H, 1)
    W2 = u(ks[3], (1, H), s2)
    b2 = u(ks[4], (1,), s2)

    sl = 1.0 / H ** 0.5                            # LSTM(2H+E -> H), 1 layer
    Wih = u(ks[5], (4 * H, 2 * H + E), sl)
    Whh = u(ks[6], (4 * H, H), sl)
    bih = u(ks[7], (4 * H,), sl)
    bhh = u(ks[8], (4 * H,), sl)

    sf = 1.0 / (3 * H) ** 0.5                      # fc: Linear(3H, O)
    Wfc = u(ks[9], (O, 3 * H), sf)
    bfc = u(ks[10], (O,), sf)

    md = matmul_dtype
    # energy Linear(3H,H): cat order (hidden, enc) -> first H input cols are the hidden part.
    w1h = W1[:, :H].T                               # (H, H)
    w1e = W1[:, H:].T                               # (2H, H)
    # hidden enters via the [emb|h] input through zero rows for emb (lane-aligned, no slice).
    w1eh = jnp.concatenate([jnp.zeros((E, H), jnp.float32), w1h], axis=0)   # (E+H, H)

    # LSTM: rnn_input = cat(ctx, emb); gates = x @ Wih.T + h @ Whh.T + (bih + bhh).
    w_lstm_ctx = Wih[:, :2 * H].T                   # (2H, 4H)
    w_lstm_eh = jnp.concatenate([Wih[:, 2 * H:].T, Whh.T], axis=0)          # (E+H, 4H)

    # fc input = cat(lstm_output, ctx).
    w_fc_h = Wfc[:, :H].T                           # (H, O)
    w_fc_ctx = Wfc[:, H:].T                         # (2H, O)

    return dict(
        embedding=embedding,
        w1eh=w1eh.astype(md), w1e=w1e.astype(md),
        b1=b1[None, :], w2=W2, b2=b2[None, :],
        w_lstm_ctx=w_lstm_ctx.astype(md), w_lstm_eh=w_lstm_eh.astype(md),
        bg=(bih + bhh)[None, :],
        w_fc_h=w_fc_h.astype(md), w_fc_ctx=w_fc_ctx.astype(md),
        bfc=bfc[None, :],
    )


def decoder_reference(params, x_tok, encoder_states, hidden, cell, attention_mask=None):
    """Pure-JAX f32 reference mirroring the PyTorch forward, for verification."""
    f = lambda a: jnp.asarray(a, jnp.float32)
    emb = f(params["embedding"])[x_tok]
    N, S, _ = encoder_states.shape
    H = hidden.shape[-1]
    E = emb.shape[-1]
    enc = f(encoder_states)
    h0, c0 = f(hidden[0]), f(cell[0])
    w1h = f(params["w1eh"])[E:]                     # (H, H); emb rows are zero
    h_rep = jnp.broadcast_to(h0[:, None, :], (N, S, H))
    e1 = jnp.maximum(h_rep @ w1h + enc @ f(params["w1e"]) + params["b1"][0], 0.0)
    energy = jnp.sum(e1 * params["w2"][0], axis=-1) + params["b2"][0, 0]
    if attention_mask is not None:
        energy = jnp.where(attention_mask, energy, jnp.float32(-1e37))
    attn = jax.nn.softmax(energy, axis=1)
    ctx = jnp.einsum('ns,nsl->nl', attn, enc)
    embh = jnp.concatenate([emb, h0], axis=1)
    gates = (ctx @ f(params["w_lstm_ctx"]) + embh @ f(params["w_lstm_eh"])
             + params["bg"][0])
    i_g = jax.nn.sigmoid(gates[:, :H]); f_g = jax.nn.sigmoid(gates[:, H:2 * H])
    g_g = jnp.tanh(gates[:, 2 * H:3 * H]); o_g = jax.nn.sigmoid(gates[:, 3 * H:])
    c_new = f_g * c0 + i_g * g_g
    h_new = o_g * jnp.tanh(c_new)
    pred = h_new @ f(params["w_fc_h"]) + ctx @ f(params["w_fc_ctx"]) + params["bfc"][0]
    return pred, h_new[None], c_new[None]


if __name__ == "__main__":
    key = jax.random.PRNGKey(0)
    input_size = 32     # vocab
    E = 16              # embedding_size
    H = 32              # hidden_size
    O = 32              # output_size
    N = 2               # batch
    S = 8               # encoder sequence length

    pk, xk, ek, hk, ck = jax.random.split(key, 5)
    params = init_params(pk, input_size, E, H, O)

    x_tok = jax.random.randint(xk, (N,), 0, input_size)                     # (N,)
    encoder_states = jax.random.normal(ek, (N, S, 2 * H), jnp.float32)      # (N, S, 2H)
    hidden = jax.random.normal(hk, (1, N, H), jnp.float32)                  # (1, N, H)
    cell = jax.random.normal(ck, (1, N, H), jnp.float32)
    attention_mask = jnp.ones((N, S), bool).at[:, S - 2:].set(False)        # mask last 2

    pred, h_new, c_new = jax.block_until_ready(
        decoder_forward(params, x_tok, encoder_states, hidden, cell, attention_mask))

    pred_r, h_r, c_r = decoder_reference(params, x_tok, encoder_states, hidden, cell,
                                         attention_mask)
    # bf16 matmul operands + approx softmax reciprocal -> relaxed (but still tight) tols.
    assert jnp.allclose(pred, pred_r, atol=2e-2, rtol=2e-2)
    assert jnp.allclose(h_new, h_r, atol=2e-2, rtol=2e-2)
    assert jnp.allclose(c_new, c_r, atol=2e-2, rtol=2e-2)
    assert pred.shape == (N, O) and h_new.shape == (1, N, H) and c_new.shape == (1, N, H)

    print("KERNEL_OK")
</pallas_src>

<mosaic_0001>
module attributes {stable_mosaic.version = 11 : i64} {
  func.func @_decoder_kernel(%arg0: i32, %arg1: memref<8x48xbf16, #tpu.memory_space<vmem>>, %arg2: memref<64x64xbf16, #tpu.memory_space<vmem>>, %arg3: memref<8x32xf32, #tpu.memory_space<vmem>>, %arg4: memref<8x8xf32, #tpu.memory_space<vmem>>, %arg5: memref<48x32xbf16, #tpu.memory_space<vmem>>, %arg6: memref<64x32xbf16, #tpu.memory_space<vmem>>, %arg7: memref<1x32xf32, #tpu.memory_space<vmem>>, %arg8: memref<1x32xf32, #tpu.memory_space<vmem>>, %arg9: memref<1x1xf32, #tpu.memory_space<vmem>>, %arg10: memref<64x128xbf16, #tpu.memory_space<vmem>>, %arg11: memref<48x128xbf16, #tpu.memory_space<vmem>>, %arg12: memref<1x128xf32, #tpu.memory_space<vmem>>, %arg13: memref<32x32xbf16, #tpu.memory_space<vmem>>, %arg14: memref<64x32xbf16, #tpu.memory_space<vmem>>, %arg15: memref<1x32xf32, #tpu.memory_space<vmem>>, %arg16: memref<8x96xf32, #tpu.memory_space<vmem>>) attributes {dimension_semantics = [#tpu.dimension_semantics<parallel>], iteration_bounds = array<i64: 1>, scalar_prefetch = 0 : i64, scratch_operands = 0 : i64, tpu.core_type = #tpu.core_type<tc>, window_params = [{transform_indices = @transform_0, window_bounds = array<i64: 8, 48>}, {transform_indices = @transform_1, window_bounds = array<i64: 64, 64>}, {transform_indices = @transform_2, window_bounds = array<i64: 8, 32>}, {transform_indices = @transform_3, window_bounds = array<i64: 8, 8>}, {pipeline_mode = #tpu.pipeline_mode<synchronous>, transform_indices = @transform_4, window_bounds = array<i64: 48, 32>}, {pipeline_mode = #tpu.pipeline_mode<synchronous>, transform_indices = @transform_5, window_bounds = array<i64: 64, 32>}, {pipeline_mode = #tpu.pipeline_mode<synchronous>, transform_indices = @transform_6, window_bounds = array<i64: 1, 32>}, {pipeline_mode = #tpu.pipeline_mode<synchronous>, transform_indices = @transform_7, window_bounds = array<i64: 1, 32>}, {pipeline_mode = #tpu.pipeline_mode<synchronous>, transform_indices = @transform_8, window_bounds = array<i64: 1, 1>}, {pipeline_mode = #tpu.pipeline_mode<synchronous>, transform_indices = @transform_9, window_bounds = array<i64: 64, 128>}, {pipeline_mode = #tpu.pipeline_mode<synchronous>, transform_indices = @transform_10, window_bounds = array<i64: 48, 128>}, {pipeline_mode = #tpu.pipeline_mode<synchronous>, transform_indices = @transform_11, window_bounds = array<i64: 1, 128>}, {pipeline_mode = #tpu.pipeline_mode<synchronous>, transform_indices = @transform_12, window_bounds = array<i64: 32, 32>}, {pipeline_mode = #tpu.pipeline_mode<synchronous>, transform_indices = @transform_13, window_bounds = array<i64: 64, 32>}, {pipeline_mode = #tpu.pipeline_mode<synchronous>, transform_indices = @transform_14, window_bounds = array<i64: 1, 32>}, {transform_indices = @transform_15, window_bounds = array<i64: 8, 96>}]} {
    %c0 = arith.constant 0 : index
    %c0_0 = arith.constant 0 : index
    %0 = vector.load %arg1[%c0, %c0_0] : memref<8x48xbf16, #tpu.memory_space<vmem>>, vector<8x48xbf16>
    %c0_1 = arith.constant 0 : index
    %c0_2 = arith.constant 0 : index
    %1 = vector.load %arg2[%c0_1, %c0_2] : memref<64x64xbf16, #tpu.memory_space<vmem>>, vector<64x64xbf16>
    %c0_3 = arith.constant 0 : index
    %c0_4 = arith.constant 0 : index
    %2 = vector.load %arg3[%c0_3, %c0_4] : memref<8x32xf32, #tpu.memory_space<vmem>>, vector<8x32xf32>
    %c0_5 = arith.constant 0 : index
    %c0_6 = arith.constant 0 : index
    %3 = vector.load %arg4[%c0_5, %c0_6] : memref<8x8xf32, #tpu.memory_space<vmem>>, vector<8x8xf32>
    %c0_7 = arith.constant 0 : index
    %c0_8 = arith.constant 0 : index
    %4 = vector.load %arg5[%c0_7, %c0_8] : memref<48x32xbf16, #tpu.memory_space<vmem>>, vector<48x32xbf16>
    %cst = arith.constant dense<0.000000e+00> : vector<8x32xf32>
    %5 = tpu.matmul %0, %4, %cst {dimension_numbers = #tpu.dot_dimension_numbers<[1], [0], [0], [1], [0, 0, 1, 1], [], []>} : vector<8x48xbf16>, vector<48x32xbf16>, vector<8x32xf32> -> vector<8x32xf32>
    %c0_9 = arith.constant 0 : index
    %c0_10 = arith.constant 0 : index
    %6 = vector.load %arg6[%c0_9, %c0_10] : memref<64x32xbf16, #tpu.memory_space<vmem>>, vector<64x32xbf16>
    %cst_11 = arith.constant dense<0.000000e+00> : vector<64x32xf32>
    %7 = tpu.matmul %1, %6, %cst_11 {dimension_numbers = #tpu.dot_dimension_numbers<[1], [0], [0], [1], [0, 0, 1, 1], [], []>} : vector<64x64xbf16>, vector<64x32xbf16>, vector<64x32xf32> -> vector<64x32xf32>
    %8 = vector.shape_cast %7 : vector<64x32xf32> to vector<8x8x32xf32>
    %9 = vector.shape_cast %5 : vector<8x32xf32> to vector<8x1x32xf32>
    %10 = vector.broadcast %9 : vector<8x1x32xf32> to vector<8x8x32xf32>
    %11 = arith.addf %8, %10 : vector<8x8x32xf32>
    %c0_12 = arith.constant 0 : index
    %c0_13 = arith.constant 0 : index
    %12 = vector.load %arg7[%c0_12, %c0_13] : memref<1x32xf32, #tpu.memory_space<vmem>>, vector<1x32xf32>
    %13 = vector.shape_cast %12 : vector<1x32xf32> to vector<1x1x32xf32>
    %14 = vector.broadcast %13 : vector<1x1x32xf32> to vector<8x8x32xf32>
    %15 = arith.addf %11, %14 : vector<8x8x32xf32>
    %cst_14 = arith.constant 0.000000e+00 : f32
    %16 = vector.broadcast %cst_14 : f32 to vector<8x8x32xf32>
    %17 = arith.maximumf %15, %16 : vector<8x8x32xf32>
    %c0_15 = arith.constant 0 : index
    %c0_16 = arith.constant 0 : index
    %18 = vector.load %arg8[%c0_15, %c0_16] : memref<1x32xf32, #tpu.memory_space<vmem>>, vector<1x32xf32>
    %19 = vector.shape_cast %18 : vector<1x32xf32> to vector<1x1x32xf32>
    %20 = vector.broadcast %19 : vector<1x1x32xf32> to vector<8x8x32xf32>
    %21 = arith.mulf %17, %20 : vector<8x8x32xf32>
    %cst_17 = arith.constant dense<0.000000e+00> : vector<8x8xf32>
    %22 = vector.multi_reduction <add>, %21, %cst_17 [2] : vector<8x8x32xf32> to vector<8x8xf32>
    %c0_18 = arith.constant 0 : index
    %c0_19 = arith.constant 0 : index
    %23 = vector.load %arg9[%c0_18, %c0_19] : memref<1x1xf32, #tpu.memory_space<vmem>>, vector<1x1xf32>
    %24 = vector.broadcast %23 : vector<1x1xf32> to vector<8x8xf32>
    %25 = arith.addf %22, %24 : vector<8x8xf32>
    %cst_20 = arith.constant 0.000000e+00 : f32
    %26 = vector.broadcast %cst_20 : f32 to vector<8x8xf32>
    %27 = arith.cmpf ogt, %3, %26 : vector<8x8xf32>
    %cst_21 = arith.constant -9.99999993E+36 : f32
    %28 = vector.broadcast %cst_21 : f32 to vector<8x8xf32>
    %29 = arith.select %27, %25, %28 : vector<8x8xi1>, vector<8x8xf32>
    %cst_22 = arith.constant dense<0xFF800000> : vector<8xf32>
    %30 = vector.multi_reduction <maximumf>, %29, %cst_22 [1] : vector<8x8xf32> to vector<8xf32>
    %31 = vector.shape_cast %30 : vector<8xf32> to vector<8x1xf32>
    %32 = vector.broadcast %31 : vector<8x1xf32> to vector<8x8xf32>
    %33 = arith.subf %29, %32 : vector<8x8xf32>
    %34 = math.exp %33 : vector<8x8xf32>
    %cst_23 = arith.constant dense<0.000000e+00> : vector<8xf32>
    %35 = vector.multi_reduction <add>, %34, %cst_23 [1] : vector<8x8xf32> to vector<8xf32>
    %36 = vector.shape_cast %35 : vector<8xf32> to vector<8x1xf32>
    %37 = tpu.reciprocal %36 {approx = true} : vector<8x1xf32> -> vector<8x1xf32>
    %38 = vector.broadcast %37 : vector<8x1xf32> to vector<8x8xf32>
    %39 = arith.mulf %34, %38 : vector<8x8xf32>
    %40 = arith.extf %1 : vector<64x64xbf16> to vector<64x64xf32>
    %41 = vector.shape_cast %40 : vector<64x64xf32> to vector<8x8x64xf32>
    %42 = vector.shape_cast %39 : vector<8x8xf32> to vector<8x8x1xf32>
    %43 = vector.broadcast %42 : vector<8x8x1xf32> to vector<8x8x64xf32>
    %44 = arith.mulf %43, %41 : vector<8x8x64xf32>
    %cst_24 = arith.constant dense<0.000000e+00> : vector<8x64xf32>
    %45 = vector.multi_reduction <add>, %44, %cst_24 [1] : vector<8x8x64xf32> to vector<8x64xf32>
    %46 = arith.truncf %45 : vector<8x64xf32> to vector<8x64xbf16>
    %c0_25 = arith.constant 0 : index
    %c0_26 = arith.constant 0 : index
    %47 = vector.load %arg10[%c0_25, %c0_26] : memref<64x128xbf16, #tpu.memory_space<vmem>>, vector<64x128xbf16>
    %cst_27 = arith.constant dense<0.000000e+00> : vector<8x128xf32>
    %48 = tpu.matmul %46, %47, %cst_27 {dimension_numbers = #tpu.dot_dimension_numbers<[1], [0], [0], [1], [0, 0, 1, 1], [], []>} : vector<8x64xbf16>, vector<64x128xbf16>, vector<8x128xf32> -> vector<8x128xf32>
    %c0_28 = arith.constant 0 : index
    %c0_29 = arith.constant 0 : index
    %49 = vector.load %arg11[%c0_28, %c0_29] : memref<48x128xbf16, #tpu.memory_space<vmem>>, vector<48x128xbf16>
    %cst_30 = arith.constant dense<0.000000e+00> : vector<8x128xf32>
    %50 = tpu.matmul %0, %49, %cst_30 {dimension_numbers = #tpu.dot_dimension_numbers<[1], [0], [0], [1], [0, 0, 1, 1], [], []>} : vector<8x48xbf16>, vector<48x128xbf16>, vector<8x128xf32> -> vector<8x128xf32>
    %51 = arith.addf %48, %50 : vector<8x128xf32>
    %c0_31 = arith.constant 0 : index
    %c0_32 = arith.constant 0 : index
    %52 = vector.load %arg12[%c0_31, %c0_32] : memref<1x128xf32, #tpu.memory_space<vmem>>, vector<1x128xf32>
    %53 = vector.broadcast %52 : vector<1x128xf32> to vector<8x128xf32>
    %54 = arith.addf %51, %53 : vector<8x128xf32>
    %55 = vector.extract_strided_slice %54 {offsets = [0, 0], sizes = [8, 32], strides = [1, 1]} : vector<8x128xf32> to vector<8x32xf32>
    %56 = arith.negf %55 : vector<8x32xf32>
    %57 = math.exp %56 : vector<8x32xf32>
    %cst_33 = arith.constant 1.000000e+00 : f32
    %58 = vector.broadcast %cst_33 : f32 to vector<8x32xf32>
    %59 = arith.addf %58, %57 : vector<8x32xf32>
    %60 = arith.divf %58, %59 : vector<8x32xf32>
    %61 = vector.extract_strided_slice %54 {offsets = [0, 32], sizes = [8, 32], strides = [1, 1]} : vector<8x128xf32> to vector<8x32xf32>
    %62 = arith.negf %61 : vector<8x32xf32>
    %63 = math.exp %62 : vector<8x32xf32>
    %cst_34 = arith.constant 1.000000e+00 : f32
    %64 = vector.broadcast %cst_34 : f32 to vector<8x32xf32>
    %65 = arith.addf %64, %63 : vector<8x32xf32>
    %66 = arith.divf %64, %65 : vector<8x32xf32>
    %67 = vector.extract_strided_slice %54 {offsets = [0, 64], sizes = [8, 32], strides = [1, 1]} : vector<8x128xf32> to vector<8x32xf32>
    %68 = math.tanh %67 : vector<8x32xf32>
    %69 = vector.extract_strided_slice %54 {offsets = [0, 96], sizes = [8, 32], strides = [1, 1]} : vector<8x128xf32> to vector<8x32xf32>
    %70 = arith.negf %69 : vector<8x32xf32>
    %71 = math.exp %70 : vector<8x32xf32>
    %cst_35 = arith.constant 1.000000e+00 : f32
    %72 = vector.broadcast %cst_35 : f32 to vector<8x32xf32>
    %73 = arith.addf %72, %71 : vector<8x32xf32>
    %74 = arith.divf %72, %73 : vector<8x32xf32>
    %75 = arith.mulf %66, %2 : vector<8x32xf32>
    %76 = arith.mulf %60, %68 : vector<8x32xf32>
    %77 = arith.addf %75, %76 : vector<8x32xf32>
    %78 = math.tanh %77 : vector<8x32xf32>
    %79 = arith.mulf %74, %78 : vector<8x32xf32>
    %80 = arith.truncf %79 : vector<8x32xf32> to vector<8x32xbf16>
    %c0_36 = arith.constant 0 : index
    %c0_37 = arith.constant 0 : index
    %81 = vector.load %arg13[%c0_36, %c0_37] : memref<32x32xbf16, #tpu.memory_space<vmem>>, vector<32x32xbf16>
    %cst_38 = arith.constant dense<0.000000e+00> : vector<8x32xf32>
    %82 = tpu.matmul %80, %81, %cst_38 {dimension_numbers = #tpu.dot_dimension_numbers<[1], [0], [0], [1], [0, 0, 1, 1], [], []>} : vector<8x32xbf16>, vector<32x32xbf16>, vector<8x32xf32> -> vector<8x32xf32>
    %c0_39 = arith.constant 0 : index
    %c0_40 = arith.constant 0 : index
    %83 = vector.load %arg14[%c0_39, %c0_40] : memref<64x32xbf16, #tpu.memory_space<vmem>>, vector<64x32xbf16>
    %cst_41 = arith.constant dense<0.000000e+00> : vector<8x32xf32>
    %84 = tpu.matmul %46, %83, %cst_41 {dimension_numbers = #tpu.dot_dimension_numbers<[1], [0], [0], [1], [0, 0, 1, 1], [], []>} : vector<8x64xbf16>, vector<64x32xbf16>, vector<8x32xf32> -> vector<8x32xf32>
    %85 = arith.addf %82, %84 : vector<8x32xf32>
    %c0_42 = arith.constant 0 : index
    %c0_43 = arith.constant 0 : index
    %86 = vector.load %arg15[%c0_42, %c0_43] : memref<1x32xf32, #tpu.memory_space<vmem>>, vector<1x32xf32>
    %87 = vector.broadcast %86 : vector<1x32xf32> to vector<8x32xf32>
    %88 = arith.addf %85, %87 : vector<8x32xf32>
    %89 = tpu.concatenate %88, %79, %77 in 1 : vector<8x32xf32>, vector<8x32xf32>, vector<8x32xf32> -> vector<8x96xf32>
    %c0_44 = arith.constant 0 : index
    %c0_45 = arith.constant 0 : index
    %90 = vector.load %arg16[%c0_44, %c0_45] : memref<8x96xf32, #tpu.memory_space<vmem>>, vector<8x96xf32>
    tpu.vector_store %arg16[%c0_44, %c0_45], %89 {strides = array<i32>} : memref<8x96xf32, #tpu.memory_space<vmem>>, vector<8x96xf32>,
    return
  }
  func.func @transform_0(%arg0: i32) -> (i32, i32) {
    %c0_i32 = arith.constant 0 : i32
    %c0_i32_0 = arith.constant 0 : i32
    return %arg0, %c0_i32 : i32, i32
  }
  func.func @transform_1(%arg0: i32) -> (i32, i32) {
    %c0_i32 = arith.constant 0 : i32
    %c0_i32_0 = arith.constant 0 : i32
    return %arg0, %c0_i32 : i32, i32
  }
  func.func @transform_2(%arg0: i32) -> (i32, i32) {
    %c0_i32 = arith.constant 0 : i32
    %c0_i32_0 = arith.constant 0 : i32
    return %arg0, %c0_i32 : i32, i32
  }
  func.func @transform_3(%arg0: i32) -> (i32, i32) {
    %c0_i32 = arith.constant 0 : i32
    %c0_i32_0 = arith.constant 0 : i32
    return %arg0, %c0_i32 : i32, i32
  }
  func.func @transform_4(%arg0: i32) -> (i32, i32) {
    %c0_i32 = arith.constant 0 : i32
    %c0_i32_0 = arith.constant 0 : i32
    %c0_i32_1 = arith.constant 0 : i32
    return %c0_i32, %c0_i32_0 : i32, i32
  }
  func.func @transform_5(%arg0: i32) -> (i32, i32) {
    %c0_i32 = arith.constant 0 : i32
    %c0_i32_0 = arith.constant 0 : i32
    %c0_i32_1 = arith.constant 0 : i32
    return %c0_i32, %c0_i32_0 : i32, i32
  }
  func.func @transform_6(%arg0: i32) -> (i32, i32) {
    %c0_i32 = arith.constant 0 : i32
    %c0_i32_0 = arith.constant 0 : i32
    %c0_i32_1 = arith.constant 0 : i32
    return %c0_i32, %c0_i32_0 : i32, i32
  }
  func.func @transform_7(%arg0: i32) -> (i32, i32) {
    %c0_i32 = arith.constant 0 : i32
    %c0_i32_0 = arith.constant 0 : i32
    %c0_i32_1 = arith.constant 0 : i32
    return %c0_i32, %c0_i32_0 : i32, i32
  }
  func.func @transform_8(%arg0: i32) -> (i32, i32) {
    %c0_i32 = arith.constant 0 : i32
    %c0_i32_0 = arith.constant 0 : i32
    %c0_i32_1 = arith.constant 0 : i32
    return %c0_i32, %c0_i32_0 : i32, i32
  }
  func.func @transform_9(%arg0: i32) -> (i32, i32) {
    %c0_i32 = arith.constant 0 : i32
    %c0_i32_0 = arith.constant 0 : i32
    %c0_i32_1 = arith.constant 0 : i32
    return %c0_i32, %c0_i32_0 : i32, i32
  }
  func.func @transform_10(%arg0: i32) -> (i32, i32) {
    %c0_i32 = arith.constant 0 : i32
    %c0_i32_0 = arith.constant 0 : i32
    %c0_i32_1 = arith.constant 0 : i32
    return %c0_i32, %c0_i32_0 : i32, i32
  }
  func.func @transform_11(%arg0: i32) -> (i32, i32) {
    %c0_i32 = arith.constant 0 : i32
    %c0_i32_0 = arith.constant 0 : i32
    %c0_i32_1 = arith.constant 0 : i32
    return %c0_i32, %c0_i32_0 : i32, i32
  }
  func.func @transform_12(%arg0: i32) -> (i32, i32) {
    %c0_i32 = arith.constant 0 : i32
    %c0_i32_0 = arith.constant 0 : i32
    %c0_i32_1 = arith.constant 0 : i32
    return %c0_i32, %c0_i32_0 : i32, i32
  }
  func.func @transform_13(%arg0: i32) -> (i32, i32) {
    %c0_i32 = arith.constant 0 : i32
    %c0_i32_0 = arith.constant 0 : i32
    %c0_i32_1 = arith.constant 0 : i32
    return %c0_i32, %c0_i32_0 : i32, i32
  }
  func.func @transform_14(%arg0: i32) -> (i32, i32) {
    %c0_i32 = arith.constant 0 : i32
    %c0_i32_0 = arith.constant 0 : i32
    %c0_i32_1 = arith.constant 0 : i32
    return %c0_i32, %c0_i32_0 : i32, i32
  }
  func.func @transform_15(%arg0: i32) -> (i32, i32) {
    %c0_i32 = arith.constant 0 : i32
    %c0_i32_0 = arith.constant 0 : i32
    return %arg0, %c0_i32 : i32, i32
  }
}

</mosaic_0001>

<llo_original>
// kernel: tpu_custom_call.1
$region0: #{tpu_custom_call.1}
  #allocation0 [shape = 'u32[]', space=smem, size = 0x4, offset = 0x4, fixed_abs, tag = 'smem constant byte address 0x4 - core index']
  #allocation1 [shape = 'u32[144,128]{1,0:T(1,128)}', space=vmem, size = 0x12000, scoped, tag = 'internal scratch']
  #allocation2 [shape = 'f32[1,1]{1,0:T(1,128)S(1)}', space=vmem, size = 0x200, scoped, tag = 'scoped memory for tpu_custom_call.1']
  %s0 = inlined_call_operand.hbm [shape: bf16[8,48], index: 0, kind: input, shape index: {}]
  %s1 = inlined_call_operand.vmem [shape: bf16[64,64], index: 1, kind: input, shape index: {}]
  %s2 = inlined_call_operand.hbm [shape: f32[8,32], index: 2, kind: input, shape index: {}]
  %s3 = inlined_call_operand.hbm [shape: f32[8,8], index: 3, kind: input, shape index: {}]
  %s4 = inlined_call_operand.vmem [shape: bf16[48,32], index: 4, kind: input, shape index: {}]
  %s5 = inlined_call_operand.vmem [shape: bf16[64,32], index: 5, kind: input, shape index: {}]
  %s6 = inlined_call_operand.vmem [shape: f32[1,32], index: 6, kind: input, shape index: {}]
  %s7 = inlined_call_operand.vmem [shape: f32[1,32], index: 7, kind: input, shape index: {}]
  %s8 = inlined_call_operand.<no memory space> [shape: f32[1,1], index: 8, kind: input, shape index: {}]
  %s9 = inlined_call_operand.vmem [shape: bf16[64,128], index: 9, kind: input, shape index: {}]
  %s10 = inlined_call_operand.vmem [shape: bf16[48,128], index: 10, kind: input, shape index: {}]
  %s11 = inlined_call_operand.vmem [shape: f32[1,128], index: 11, kind: input, shape index: {}]
  %s12 = inlined_call_operand.vmem [shape: bf16[32,32], index: 12, kind: input, shape index: {}]
  %s13 = inlined_call_operand.vmem [shape: bf16[64,32], index: 13, kind: input, shape index: {}]
  %s14 = inlined_call_operand.vmem [shape: f32[1,32], index: 14, kind: input, shape index: {}]
  %s15 = inlined_call_operand.hbm [shape: f32[8,96], index: 15, kind: output, shape index: {}]
  %s16 = sld [smem:[#allocation0]]
  $region82: #{tpu_custom_call.1} parent=0
    _
  %s18 = ssub.s32 1, %s16
  %s19 = scalar_select 0, %s18, %s16
  %v20 = vstv %s8
  %21 = vst [vmem:[#allocation2] sm:$0x1] %v20
  $region1: #{tpu_custom_call.1} parent=0
    #allocation3 [shape = 'u8[2048]{0}', space=vmem, size = 0x800, scoped, tag = 'input window, operand 0, single buffered']
    #allocation4 [shape = 's32[1]{0}', space=sflag, size = 0x4, scoped, tag = 'scoped memory for tpu_custom_call.1']
    #allocation5 [shape = 's32[1]{0}', space=sflag, size = 0x4, scoped, tag = 'scoped memory for tpu_custom_call.1']
    #allocation6 [shape = 'u8[4096]{0}', space=vmem, size = 0x1000, scoped, tag = 'input window, operand 2, single buffered']
    #allocation7 [shape = 's32[1]{0}', space=sflag, size = 0x4, scoped, tag = 'scoped memory for tpu_custom_call.1']
    #allocation8 [shape = 'u8[4096]{0}', space=vmem, size = 0x1000, scoped, tag = 'input window, operand 3, single buffered']
    #allocation9 [shape = 'u8[4096]{0}', space=vmem, size = 0x1000, scoped, tag = 'output window, operand 0, single buffered']
    %22 = vsyncpa [#allocation4], 0
    %23 = vsyncpa [#allocation7], 0
    %24 = vsyncpa [#allocation5], 0
    // Predicated region
    $region2: #{tpu_custom_call.1} parent=1 // pred_check
      _
    $region3: #{tpu_custom_call.1} parent=1 // pred_check_branch
      %26 = sbr.rel (0) target = $region5
    $region4: #{tpu_custom_call.1} parent=1 // pred_region
      %s28 = ssub.s32 64, 64
      %29 = vsyncadd [#allocation4], %s28
      %s31 = sshll.u32 [#allocation3], 4
      %s32 = int_to_ptr.vmem [resolvable:$true] %s31
      %34 = dma.hbm_to_vmem [thread:$0]  %s0, 64, %s32, [#allocation4]
    $region5: #{tpu_custom_call.1} parent=1 // pred_fallthru
      _
    // Predicated region
    $region6: #{tpu_custom_call.1} parent=1 // pred_check
      _
    $region7: #{tpu_custom_call.1} parent=1 // pred_check_branch
      %36 = sbr.rel (0) target = $region9
    $region8: #{tpu_custom_call.1} parent=1 // pred_region
      _
    $region9: #{tpu_custom_call.1} parent=1 // pred_fallthru
      _
    // Predicated region
    $region10: #{tpu_custom_call.1} parent=1 // pred_check
      _
    $region11: #{tpu_custom_call.1} parent=1 // pred_check_branch
      %38 = sbr.rel (0) target = $region13
    $region12: #{tpu_custom_call.1} parent=1 // pred_region
      %s40 = ssub.s32 128, 128
      %41 = vsyncadd [#allocation7], %s40
      %s43 = sshll.u32 [#allocation6], 4
      %s44 = int_to_ptr.vmem [resolvable:$true] %s43
      %46 = dma.hbm_to_vmem [thread:$0]  %s2, 128, %s44, [#allocation7]
    $region13: #{tpu_custom_call.1} parent=1 // pred_fallthru
      _
    // Predicated region
    $region14: #{tpu_custom_call.1} parent=1 // pred_check
      _
    $region15: #{tpu_custom_call.1} parent=1 // pred_check_branch
      %48 = sbr.rel (0) target = $region17
    $region16: #{tpu_custom_call.1} parent=1 // pred_region
      %s50 = ssub.s32 128, 128
      %51 = vsyncadd [#allocation7], %s50
      %s53 = sshll.u32 [#allocation8], 4
      %s54 = int_to_ptr.vmem [resolvable:$true] %s53
      %56 = dma.hbm_to_vmem [thread:$0]  %s3, 128, %s54, [#allocation7]
    $region17: #{tpu_custom_call.1} parent=1 // pred_fallthru
      _
    // Predicated region
    $region18: #{tpu_custom_call.1} parent=1 // pred_check
      _
    $region19: #{tpu_custom_call.1} parent=1 // pred_check_branch
      %58 = sbr.rel (0) target = $region21
    $region20: #{tpu_custom_call.1} parent=1 // pred_region
      _
    $region21: #{tpu_custom_call.1} parent=1 // pred_fallthru
      _
    // Predicated region
    $region22: #{tpu_custom_call.1} parent=1 // pred_check
      _
    $region23: #{tpu_custom_call.1} parent=1 // pred_check_branch
      %60 = sbr.rel (0) target = $region25
    $region24: #{tpu_custom_call.1} parent=1 // pred_region
      _
    $region25: #{tpu_custom_call.1} parent=1 // pred_fallthru
      _
    // Predicated region
    $region26: #{tpu_custom_call.1} parent=1 // pred_check
      _
    $region27: #{tpu_custom_call.1} parent=1 // pred_check_branch
      %62 = sbr.rel (0) target = $region29
    $region28: #{tpu_custom_call.1} parent=1 // pred_region
      _
    $region29: #{tpu_custom_call.1} parent=1 // pred_fallthru
      _
    // Predicated region
    $region30: #{tpu_custom_call.1} parent=1 // pred_check
      _
    $region31: #{tpu_custom_call.1} parent=1 // pred_check_branch
      %64 = sbr.rel (0) target = $region33
    $region32: #{tpu_custom_call.1} parent=1 // pred_region
      _
    $region33: #{tpu_custom_call.1} parent=1 // pred_fallthru
      _
    // Predicated region
    $region34: #{tpu_custom_call.1} parent=1 // pred_check
      _
    $region35: #{tpu_custom_call.1} parent=1 // pred_check_branch
      %66 = sbr.rel (0) target = $region37
    $region36: #{tpu_custom_call.1} parent=1 // pred_region
      _
    $region37: #{tpu_custom_call.1} parent=1 // pred_fallthru
      _
    // Predicated region
    $region38: #{tpu_custom_call.1} parent=1 // pred_check
      _
    $region39: #{tpu_custom_call.1} parent=1 // pred_check_branch
      %68 = sbr.rel (0) target = $region41
    $region40: #{tpu_custom_call.1} parent=1 // pred_region
      _
    $region41: #{tpu_custom_call.1} parent=1 // pred_fallthru
      _
    // Predicated region
    $region42: #{tpu_custom_call.1} parent=1 // pred_check
      _
    $region43: #{tpu_custom_call.1} parent=1 // pred_check_branch
      %70 = sbr.rel (0) target = $region45
    $region44: #{tpu_custom_call.1} parent=1 // pred_region
      _
    $region45: #{tpu_custom_call.1} parent=1 // pred_fallthru
      _
    // Predicated region
    $region46: #{tpu_custom_call.1} parent=1 // pred_check
      _
    $region47: #{tpu_custom_call.1} parent=1 // pred_check_branch
      %72 = sbr.rel (0) target = $region49
    $region48: #{tpu_custom_call.1} parent=1 // pred_region
      _
    $region49: #{tpu_custom_call.1} parent=1 // pred_fallthru
      _
    // Predicated region
    $region50: #{tpu_custom_call.1} parent=1 // pred_check
      _
    $region51: #{tpu_custom_call.1} parent=1 // pred_check_branch
      %74 = sbr.rel (0) target = $region53
    $region52: #{tpu_custom_call.1} parent=1 // pred_region
      _
    $region53: #{tpu_custom_call.1} parent=1 // pred_fallthru
      _
    // Predicated region
    $region54: #{tpu_custom_call.1} parent=1 // pred_check
      _
    $region55: #{tpu_custom_call.1} parent=1 // pred_check_branch
      %76 = sbr.rel (0) target = $region57
    $region56: #{tpu_custom_call.1} parent=1 // pred_region
      _
    $region57: #{tpu_custom_call.1} parent=1 // pred_fallthru
      _
    // Predicated region
    $region58: #{tpu_custom_call.1} parent=1 // pred_check
      _
    $region59: #{tpu_custom_call.1} parent=1 // pred_check_branch
      %78 = sbr.rel (0) target = $region61
    $region60: #{tpu_custom_call.1} parent=1 // pred_region
      _
    $region61: #{tpu_custom_call.1} parent=1 // pred_fallthru
      _
    // Predicated region
    $region62: #{tpu_custom_call.1} parent=1 // pred_check
      _
    $region63: #{tpu_custom_call.1} parent=1 // pred_check_branch
      %80 = sbr.rel (0) target = $region65
    $region64: #{tpu_custom_call.1} parent=1 // pred_region
      %81 = dma.done [#allocation4], 64
    $region65: #{tpu_custom_call.1} parent=1 // pred_fallthru
      _
    // Predicated region
    $region66: #{tpu_custom_call.1} parent=1 // pred_check
      _
    $region67: #{tpu_custom_call.1} parent=1 // pred_check_branch
      %83 = sbr.rel (0) target = $region69
    $region68: #{tpu_custom_call.1} parent=1 // pred_region
      %84 = dma.done [#allocation7], 128
    $region69: #{tpu_custom_call.1} parent=1 // pred_fallthru
      _
    // Predicated region
    $region70: #{tpu_custom_call.1} parent=1 // pred_check
      _
    $region71: #{tpu_custom_call.1} parent=1 // pred_check_branch
      %86 = sbr.rel (0) target = $region73
    $region72: #{tpu_custom_call.1} parent=1 // pred_region
      %87 = dma.done [#allocation7], 128
    $region73: #{tpu_custom_call.1} parent=1 // pred_fallthru
      _
    %v89 = vld [vmem:[#allocation3] sm:$0xf]
    %v90 = vld [vmem:[%s1] sm:$0xf]
    %v91 = vld [vmem:[%s1 + $0x4] sm:$0xf]
    %v92 = vld [vmem:[%s1 + $0x8] sm:$0xf]
    %v93 = vld [vmem:[%s1 + $0xc] sm:$0xf]
    %v94 = vld [vmem:[%s1 + $0x10] sm:$0xf]
    %v95 = vld [vmem:[%s1 + $0x14] sm:$0xf]
    %v96 = vld [vmem:[%s1 + $0x18] sm:$0xf]
    %v97 = vld [vmem:[%s1 + $0x1c] sm:$0xf]
    %v98 = vld [vmem:[#allocation6] sm:$0xff]
    %v99 = vld [vmem:[#allocation8] sm:$0xff]
    %v100 = vld [vmem:[%s4] sm:$0xf]
    %v101 = vld [vmem:[%s4 + $0x4] sm:$0xf]
    %v102 = vld [vmem:[%s4 + $0x8] sm:$0xf]
    %v103 = vld [vmem:[%s4 + $0xc] sm:$0xf]
    %v104 = vld [vmem:[%s4 + $0x10] sm:$0xf]
    %v105 = vld [vmem:[%s4 + $0x14] sm:$0xf]
    %v112 = vunpack.c.l.b16 %v100
    %v113 = vunpack.c.l.b16 %v101
    %v114 = vunpack.c.l.b16 %v102
    %v115 = vunpack.c.l.b16 %v103
    %v116 = vunpack.c.l.b16 %v104
    %v117 = vunpack.c.l.b16 %v105
    %v118 = vpack.c.b16 %v113, %v112
    %v119 = vpack.c.b16 %v115, %v114
    %v120 = vpack.c.b16 %v117, %v116
    %vm124 = vcmask 392192
    %v126 = vsel %vm124, %v89, 0
    %128 = vmatprep.subr.bf16.mxu0 0
    %129 = vmatpush1.bf16.msra.mxu0 0
    %130 = vmatprep.subr.bf16.mxu0 0
    %131 = vmatpush1.bf16.msra.mxu0 0
    %132 = vmatprep.subr.bf16.mxu0 0
    %133 = vmatpush1.bf16.msra.mxu0 0
    %134 = vmatprep.subr.bf16.mxu0 0
    %135 = vmatpush1.bf16.msra.mxu0 0
    %136 = vmatprep.subr.bf16.mxu0 0
    %137 = vmatpush1.bf16.msra.mxu0 0
    %138 = vmatprep.subr.bf16.mxu0 0
    %139 = vmatpush1.bf16.msra.mxu0 %v120
    %140 = vmatprep.subr.bf16.mxu0 0
    %141 = vmatpush1.bf16.msra.mxu0 %v119
    %142 = vmatprep.subr.bf16.mxu0 0
    %143 = vmatpush1.bf16.msra.mxu0 %v118
    %144 = vmatprep.subr.bf16.mxu0 0
    %145 = vmatpush2.bf16.msra.mxu0 0
    %146 = vmatprep.subr.bf16.mxu0 0
    %147 = vmatpush2.bf16.msra.mxu0 0
    %148 = vmatprep.subr.bf16.mxu0 0
    %149 = vmatpush2.bf16.msra.mxu0 0
    %150 = vmatprep.subr.bf16.mxu0 0
    %151 = vmatpush2.bf16.msra.mxu0 0
    %152 = vmatprep.subr.bf16.mxu0 0
    %153 = vmatpush2.bf16.msra.mxu0 0
    %154 = vmatprep.subr.bf16.mxu0 0
    %155 = vmatpush2.bf16.msra.mxu0 0
    %156 = vmatprep.subr.bf16.mxu0 0
    %157 = vmatpush2.bf16.msra.mxu0 0
    %158 = vmatprep.subr.bf16.mxu0 0
    %159 = vmatpush2.bf16.msra.mxu0 0
    %160 = vmatprep.mubr.bf16.mxu0 0
    %161 = vmatmul.mubr.bf16.gmra.mxu0 %v126
    %v162 = vpop.f32.mrf.mxu0
    %v163 = vadd.f32 0.0, %v162
    %v164 = vpop.f32.mrf.mxu0
    %v165 = vpop.f32.mrf.mxu0
    %v166 = vpop.f32.mrf.mxu0
    %167 = vdwg.mxu0
    %v168 = vld [vmem:[%s5] sm:$0xf]
    %v169 = vld [vmem:[%s5 + $0x4] sm:$0xf]
    %v170 = vld [vmem:[%s5 + $0x8] sm:$0xf]
    %v171 = vld [vmem:[%s5 + $0xc] sm:$0xf]
    %v172 = vld [vmem:[%s5 + $0x10] sm:$0xf]
    %v173 = vld [vmem:[%s5 + $0x14] sm:$0xf]
    %v174 = vld [vmem:[%s5 + $0x18] sm:$0xf]
    %v175 = vld [vmem:[%s5 + $0x1c] sm:$0xf]
    %v184 = vunpack.c.l.b16 %v90
    %v185 = vunpack.c.l.b16 %v91
    %v186 = vunpack.c.l.b16 %v92
    %v187 = vunpack.c.l.b16 %v93
    %v188 = vunpack.c.l.b16 %v94
    %v189 = vunpack.c.l.b16 %v95
    %v190 = vunpack.c.l.b16 %v96
    %v191 = vunpack.c.l.b16 %v97
    %v192 = vpack.c.b16 %v185, %v184
    %v193 = vpack.c.b16 %v187, %v186
    %v194 = vpack.c.b16 %v189, %v188
    %v195 = vpack.c.b16 %v191, %v190
    %v204 = vunpack.c.l.b16 %v168
    %v205 = vunpack.c.l.b16 %v169
    %v206 = vunpack.c.l.b16 %v170
    %v207 = vunpack.c.l.b16 %v171
    %v208 = vunpack.c.l.b16 %v172
    %v209 = vunpack.c.l.b16 %v173
    %v210 = vunpack.c.l.b16 %v174
    %v211 = vunpack.c.l.b16 %v175
    %v212 = vpack.c.b16 %v205, %v204
    %v213 = vpack.c.b16 %v207, %v206
    %v214 = vpack.c.b16 %v209, %v208
    %v215 = vpack.c.b16 %v211, %v210
    %vm220 = vcmask 523264
    %v222 = vsel %vm220, %v192, 0
    %v225 = vsel %vm220, %v193, 0
    %v228 = vsel %vm220, %v194, 0
    %v231 = vsel %vm220, %v195, 0
    %233 = vmatprep.subr.bf16.mxu0 0
    %234 = vmatpush1.bf16.msra.mxu0 0
    %235 = vmatprep.subr.bf16.mxu0 0
    %236 = vmatpush1.bf16.msra.mxu0 0
    %237 = vmatprep.subr.bf16.mxu0 0
    %238 = vmatpush1.bf16.msra.mxu0 0
    %239 = vmatprep.subr.bf16.mxu0 0
    %240 = vmatpush1.bf16.msra.mxu0 0
    %241 = vmatprep.subr.bf16.mxu0 0
    %242 = vmatpush1.bf16.msra.mxu0 %v215
    %243 = vmatprep.subr.bf16.mxu0 0
    %244 = vmatpush1.bf16.msra.mxu0 %v214
    %245 = vmatprep.subr.bf16.mxu0 0
    %246 = vmatpush1.bf16.msra.mxu0 %v213
    %247 = vmatprep.subr.bf16.mxu0 0
    %248 = vmatpush1.bf16.msra.mxu0 %v212
    %249 = vmatprep.subr.bf16.mxu0 0
    %250 = vmatpush2.bf16.msra.mxu0 0
    %251 = vmatprep.subr.bf16.mxu0 0
    %252 = vmatpush2.bf16.msra.mxu0 0
    %253 = vmatprep.subr.bf16.mxu0 0
    %254 = vmatpush2.bf16.msra.mxu0 0
    %255 = vmatprep.subr.bf16.mxu0 0
    %256 = vmatpush2.bf16.msra.mxu0 0
    %257 = vmatprep.subr.bf16.mxu0 0
    %258 = vmatpush2.bf16.msra.mxu0 0
    %259 = vmatprep.subr.bf16.mxu0 0
    %260 = vmatpush2.bf16.msra.mxu0 0
    %261 = vmatprep.subr.bf16.mxu0 0
    %262 = vmatpush2.bf16.msra.mxu0 0
    %263 = vmatprep.subr.bf16.mxu0 0
    %264 = vmatpush2.bf16.msra.mxu0 0
    %265 = vmatprep.mubr.bf16.mxu0 0
    %266 = vmatmul.mubr.bf16.gmra.mxu0 %v222
    %v267 = vpop.f32.mrf.mxu0
    %v268 = vadd.f32 0.0, %v267
    %v269 = vpop.f32.mrf.mxu0
    %v270 = vpop.f32.mrf.mxu0
    %v271 = vadd.f32 0.0, %v270
    %v272 = vpop.f32.mrf.mxu0
    %273 = vmatprep.mubr.bf16.mxu0 0
    %274 = vmatmul.mubr.bf16.gmra.mxu0 %v225
    %v275 = vpop.f32.mrf.mxu0
    %v276 = vadd.f32 0.0, %v275
    %v277 = vpop.f32.mrf.mxu0
    %v278 = vpop.f32.mrf.mxu0
    %v279 = vadd.f32 0.0, %v278
    %v280 = vpop.f32.mrf.mxu0
    %281 = vmatprep.mubr.bf16.mxu0 0
    %282 = vmatmul.mubr.bf16.gmra.mxu0 %v228
    %v283 = vpop.f32.mrf.mxu0
    %v284 = vadd.f32 0.0, %v283
    %v285 = vpop.f32.mrf.mxu0
    %v286 = vpop.f32.mrf.mxu0
    %v287 = vadd.f32 0.0, %v286
    %v288 = vpop.f32.mrf.mxu0
    %289 = vmatprep.mubr.bf16.mxu0 0
    %290 = vmatmul.mubr.bf16.gmra.mxu0 %v231
    %v291 = vpop.f32.mrf.mxu0
    %v292 = vadd.f32 0.0, %v291
    %v293 = vpop.f32.mrf.mxu0
    %v294 = vpop.f32.mrf.mxu0
    %v295 = vadd.f32 0.0, %v294
    %v296 = vpop.f32.mrf.mxu0
    %297 = vdwg.mxu0
    %v299 = vcombine.high %v163, %v163
    %v301 = vunpack.c.l.s4 1966171168
    %v302 = vunpack.c.0.s8 %v301
    %v303 = vlaneseq
    %v304 = vshrl.u32 %v303, 7
    %v305 = vsub.s32 %v302, %v304
    %v306 = vrot.slane %v163, %v305
    %v308 = vunpack.c.l.s4 1966171168
    %v309 = vunpack.c.0.s8 %v308
    %v310 = vlaneseq
    %v311 = vshrl.u32 %v310, 7
    %v312 = vsub.s32 %v309, %v311
    %v313 = vrot.slane %v299, %v312
    %v314 = vcombine.high %v306, %v306
    %v315 = vcombine.high %v313, %v313
    %v317 = vunpack.c.l.s4 1966171168
    %v318 = vunpack.c.0.s8 %v317
    %v319 = vlaneseq
    %v320 = vshrl.u32 %v319, 7
    %v321 = vsub.s32 %v318, %v320
    %v322 = vrot.slane %v306, %v321
    %v324 = vunpack.c.l.s4 1966171168
    %v325 = vunpack.c.0.s8 %v324
    %v326 = vlaneseq
    %v327 = vshrl.u32 %v326, 7
    %v328 = vsub.s32 %v325, %v327
    %v329 = vrot.slane %v313, %v328
    %v331 = vunpack.c.l.s4 1966171168
    %v332 = vunpack.c.0.s8 %v331
    %v333 = vlaneseq
    %v334 = vshrl.u32 %v333, 7
    %v335 = vsub.s32 %v332, %v334
    %v336 = vrot.slane %v314, %v335
    %v338 = vunpack.c.l.s4 1966171168
    %v339 = vunpack.c.0.s8 %v338
    %v340 = vlaneseq
    %v341 = vshrl.u32 %v340, 7
    %v342 = vsub.s32 %v339, %v341
    %v343 = vrot.slane %v315, %v342
    %v344 = vcombine.high %v322, %v322
    %v345 = vcombine.high %v329, %v329
    %v346 = vcombine.high %v336, %v336
    %v347 = vcombine.high %v343, %v343
    %v348 = vlaneseq
    %v349 = vshrl.u32 %v348, 7
    %v350 = vsub.s32 0, %v349
    %v351 = vrot.slane %v322, %v350
    %v352 = vlaneseq
    %v353 = vshrl.u32 %v352, 7
    %v354 = vsub.s32 0, %v353
    %v355 = vrot.slane %v336, %v354
    %v356 = vlaneseq
    %v357 = vshrl.u32 %v356, 7
    %v358 = vsub.s32 0, %v357
    %v359 = vrot.slane %v344, %v358
    %v360 = vlaneseq
    %v361 = vshrl.u32 %v360, 7
    %v362 = vsub.s32 0, %v361
    %v363 = vrot.slane %v346, %v362
    %v364 = vlaneseq
    %v365 = vshrl.u32 %v364, 7
    %v366 = vsub.s32 0, %v365
    %v367 = vrot.slane %v329, %v366
    %v368 = vlaneseq
    %v369 = vshrl.u32 %v368, 7
    %v370 = vsub.s32 0, %v369
    %v371 = vrot.slane %v343, %v370
    %v372 = vlaneseq
    %v373 = vshrl.u32 %v372, 7
    %v374 = vsub.s32 0, %v373
    %v375 = vrot.slane %v345, %v374
    %v376 = vlaneseq
    %v377 = vshrl.u32 %v376, 7
    %v378 = vsub.s32 0, %v377
    %v379 = vrot.slane %v347, %v378
    %v388 = vadd.f32 %v268, %v351
    %v389 = vadd.f32 %v271, %v355
    %v390 = vadd.f32 %v276, %v359
    %v391 = vadd.f32 %v279, %v363
    %v392 = vadd.f32 %v284, %v367
    %v393 = vadd.f32 %v287, %v371
    %v394 = vadd.f32 %v292, %v375
    %v395 = vadd.f32 %v295, %v379
    %v396 = vld [vmem:[%s6] sm:$0x1]
    %v398 = vlaneseq
    %v399 = vshrl.u32 %v398, 7
    %v400 = vsub.s32 0, %v399
    %v401 = vrot.slane %v396, %v400
    %v403 = vadd.f32 %v388, %v401
    %v404 = vadd.f32 %v389, %v401
    %v405 = vadd.f32 %v390, %v401
    %v406 = vadd.f32 %v391, %v401
    %v407 = vadd.f32 %v392, %v401
    %v408 = vadd.f32 %v393, %v401
    %v409 = vadd.f32 %v394, %v401
    %v410 = vadd.f32 %v395, %v401
    %v411 = vmax.f32 %v403, 0.0
    %v412 = vmax.f32 %v404, 0.0
    %v413 = vmax.f32 %v405, 0.0
    %v414 = vmax.f32 %v406, 0.0
    %v415 = vmax.f32 %v407, 0.0
    %v416 = vmax.f32 %v408, 0.0
    %v417 = vmax.f32 %v409, 0.0
    %v418 = vmax.f32 %v410, 0.0
    %v419 = vld [vmem:[%s7] sm:$0x1]
    %v421 = vlaneseq
    %v422 = vshrl.u32 %v421, 7
    %v423 = vsub.s32 0, %v422
    %v424 = vrot.slane %v419, %v423
    %v426 = vmul.f32 %v411, %v424
    %v427 = vmul.f32 %v412, %v424
    %v428 = vmul.f32 %v413, %v424
    %v429 = vmul.f32 %v414, %v424
    %v430 = vmul.f32 %v415, %v424
    %v431 = vmul.f32 %v416, %v424
    %v432 = vmul.f32 %v417, %v424
    %v433 = vmul.f32 %v418, %v424
    %vm434 = vcmask 261120
    %v435 = vsel %vm434, %v426, 0.0
    %436 = vadd.xlane.f32.xlu0 %v435
    %v437 = vpop.xlane.xlu0 %436
    %v438 = vsel %vm434, %v427, 0.0
    %439 = vadd.xlane.f32.xlu0 %v438
    %v440 = vpop.xlane.xlu0 %439
    %v441 = vsel %vm434, %v428, 0.0
    %442 = vadd.xlane.f32.xlu0 %v441
    %v443 = vpop.xlane.xlu0 %442
    %v444 = vsel %vm434, %v429, 0.0
    %445 = vadd.xlane.f32.xlu0 %v444
    %v446 = vpop.xlane.xlu0 %445
    %v447 = vsel %vm434, %v430, 0.0
    %448 = vadd.xlane.f32.xlu0 %v447
    %v449 = vpop.xlane.xlu0 %448
    %v450 = vsel %vm434, %v431, 0.0
    %451 = vadd.xlane.f32.xlu0 %v450
    %v452 = vpop.xlane.xlu0 %451
    %v453 = vsel %vm434, %v432, 0.0
    %454 = vadd.xlane.f32.xlu0 %v453
    %v455 = vpop.xlane.xlu0 %454
    %v456 = vsel %vm434, %v433, 0.0
    %457 = vadd.xlane.f32.xlu0 %v456
    %v458 = vpop.xlane.xlu0 %457
    %v459 = vld [vmem:[#allocation2] sm:$0x1]
    %v461 = vlaneseq
    %v462 = vshrl.u32 %v461, 7
    %v463 = vsub.s32 0, %v462
    %v464 = vrot.slane %v459, %v463
    %465 = vset.pattern.permute.xlu0 0
    %466 = vperm.xlu0 %465, %v464
    %v467 = vpop.permute.xlu0 %466
    %v469 = vadd.f32 %v437, %v467
    %v470 = vadd.f32 %v440, %v467
    %v471 = vadd.f32 %v443, %v467
    %v472 = vadd.f32 %v446, %v467
    %v473 = vadd.f32 %v449, %v467
    %v474 = vadd.f32 %v452, %v467
    %v475 = vadd.f32 %v455, %v467
    %v476 = vadd.f32 %v458, %v467
    %vm477 = vcmp.gt.f32.partialorder %v99, 0.0
    %v486 = vlaneseq
    %v487 = vand.u32 %v486, 127
    %v488 = vlaneseq
    %v489 = vshrl.u32 %v488, 7
    %v490 = vsub.s32 %v487, %v489
    %v491 = vrot.slane %v469, %v490
    %v492 = vlaneseq
    %v493 = vshrl.u32 %v492, 7
    %v494 = vsub.s32 %v487, %v493
    %v495 = vrot.slane %v470, %v494
    %v496 = vlaneseq
    %v497 = vshrl.u32 %v496, 7
    %v498 = vsub.s32 %v487, %v497
    %v499 = vrot.slane %v471, %v498
    %v500 = vlaneseq
    %v501 = vshrl.u32 %v500, 7
    %v502 = vsub.s32 %v487, %v501
    %v503 = vrot.slane %v472, %v502
    %v504 = vlaneseq
    %v505 = vshrl.u32 %v504, 7
    %v506 = vsub.s32 %v487, %v505
    %v507 = vrot.slane %v473, %v506
    %v508 = vlaneseq
    %v509 = vshrl.u32 %v508, 7
    %v510 = vsub.s32 %v487, %v509
    %v511 = vrot.slane %v474, %v510
    %v512 = vlaneseq
    %v513 = vshrl.u32 %v512, 7
    %v514 = vsub.s32 %v487, %v513
    %v515 = vrot.slane %v475, %v514
    %v516 = vlaneseq
    %v517 = vshrl.u32 %v516, 7
    %v518 = vsub.s32 %v487, %v517
    %v519 = vrot.slane %v476, %v518
    %vm520 = vcmask 1041409
    %v521 = vsel %vm520, %v495, %v491
    %vm522 = vcmask 1042434
    %v523 = vsel %vm522, %v499, %v521
    %vm524 = vcmask 1043459
    %v525 = vsel %vm524, %v503, %v523
    %vm526 = vcmask 1044484
    %v527 = vsel %vm526, %v507, %v525
    %vm528 = vcmask 1045509
    %v529 = vsel %vm528, %v511, %v527
    %vm530 = vcmask 1046534
    %v531 = vsel %vm530, %v515, %v529
    %vm532 = vcmask 1047559
    %v533 = vsel %vm532, %v519, %v531
    %v535 = vsel %vm477, %v533, -1e+37
    %vm536 = vcmask 64512
    %v537 = vsel %vm536, %v535, -inf
    %538 = vmax.xlane.f32.xlu0 %v537
    %v539 = vpop.xlane.xlu0 %538
    %v540 = vsub.f32 %v535, %v539
    %v541 = vmul.f32 %v540, 1.442695
    %v542 = vpow.pop %v541
    %v543 = vsel %vm536, %v542, 0.0
    %544 = vadd.xlane.f32.xlu0 %v543
    %v545 = vpop.xlane.xlu0 %544
    %v546 = vrcp.pop %v545
    %v547 = vmul.f32 %v542, %v546
    %v548 = vunpack.c.l.bf16 %v90
    %v549 = vunpack.c.l.bf16 %v91
    %v550 = vunpack.c.l.bf16 %v92
    %v551 = vunpack.c.l.bf16 %v93
    %v552 = vunpack.c.l.bf16 %v94
    %v553 = vunpack.c.l.bf16 %v95
    %v554 = vunpack.c.l.bf16 %v96
    %v555 = vunpack.c.l.bf16 %v97
    %v556 = vlaneseq
    %v557 = vshrl.u32 %v556, 7
    %v558 = vsub.s32 0, %v557
    %v559 = vrot.slane %v547, %v558
    %561 = vbcast.lane.b32.xlu0 %v559, 256
    %v562 = vpop.permute.xlu0 %561
    %v563 = vlaneseq
    %v564 = vshrl.u32 %v563, 7
    %v565 = vsub.s32 1, %v564
    %v566 = vrot.slane %v547, %v565
    %568 = vbcast.lane.b32.xlu0 %v566, 256
    %v569 = vpop.permute.xlu0 %568
    %v570 = vlaneseq
    %v571 = vshrl.u32 %v570, 7
    %v572 = vsub.s32 2, %v571
    %v573 = vrot.slane %v547, %v572
    %575 = vbcast.lane.b32.xlu0 %v573, 256
    %v576 = vpop.permute.xlu0 %575
    %v577 = vlaneseq
    %v578 = vshrl.u32 %v577, 7
    %v579 = vsub.s32 3, %v578
    %v580 = vrot.slane %v547, %v579
    %582 = vbcast.lane.b32.xlu0 %v580, 256
    %v583 = vpop.permute.xlu0 %582
    %v584 = vlaneseq
    %v585 = vshrl.u32 %v584, 7
    %v586 = vsub.s32 4, %v585
    %v587 = vrot.slane %v547, %v586
    %589 = vbcast.lane.b32.xlu0 %v587, 256
    %v590 = vpop.permute.xlu0 %589
    %v591 = vlaneseq
    %v592 = vshrl.u32 %v591, 7
    %v593 = vsub.s32 5, %v592
    %v594 = vrot.slane %v547, %v593
    %596 = vbcast.lane.b32.xlu0 %v594, 256
    %v597 = vpop.permute.xlu0 %596
    %v598 = vlaneseq
    %v599 = vshrl.u32 %v598, 7
    %v600 = vsub.s32 6, %v599
    %v601 = vrot.slane %v547, %v600
    %603 = vbcast.lane.b32.xlu0 %v601, 256
    %v604 = vpop.permute.xlu0 %603
    %v605 = vlaneseq
    %v606 = vshrl.u32 %v605, 7
    %v607 = vsub.s32 7, %v606
    %v608 = vrot.slane %v547, %v607
    %610 = vbcast.lane.b32.xlu0 %v608, 256
    %v611 = vpop.permute.xlu0 %610
    %v612 = vmul.f32 %v562, %v548
    %v613 = vmul.f32 %v569, %v549
    %v614 = vmul.f32 %v576, %v550
    %v615 = vmul.f32 %v583, %v551
    %v616 = vmul.f32 %v590, %v552
    %v617 = vmul.f32 %v597, %v553
    %v618 = vmul.f32 %v604, %v554
    %v619 = vmul.f32 %v611, %v555
    %v620 = vsel %vm220, %v612, 0.0
    %v621 = vrot.slane %v620, 4
    %v622 = vadd.f32 %v620, %v621
    %v623 = vrot.slane %v622, 2
    %v624 = vadd.f32 %v622, %v623
    %v625 = vrot.slane %v624, 1
    %v626 = vadd.f32 %v624, %v625
    %v627 = vsel %vm220, %v613, 0.0
    %v628 = vrot.slane %v627, 4
    %v629 = vadd.f32 %v627, %v628
    %v630 = vrot.slane %v629, 2
    %v631 = vadd.f32 %v629, %v630
    %v632 = vrot.slane %v631, 1
    %v633 = vadd.f32 %v631, %v632
    %v634 = vsel %vm220, %v614, 0.0
    %v635 = vrot.slane %v634, 4
    %v636 = vadd.f32 %v634, %v635
    %v637 = vrot.slane %v636, 2
    %v638 = vadd.f32 %v636, %v637
    %v639 = vrot.slane %v638, 1
    %v640 = vadd.f32 %v638, %v639
    %v641 = vsel %vm220, %v615, 0.0
    %v642 = vrot.slane %v641, 4
    %v643 = vadd.f32 %v641, %v642
    %v644 = vrot.slane %v643, 2
    %v645 = vadd.f32 %v643, %v644
    %v646 = vrot.slane %v645, 1
    %v647 = vadd.f32 %v645, %v646
    %v648 = vsel %vm220, %v616, 0.0
    %v649 = vrot.slane %v648, 4
    %v650 = vadd.f32 %v648, %v649
    %v651 = vrot.slane %v650, 2
    %v652 = vadd.f32 %v650, %v651
    %v653 = vrot.slane %v652, 1
    %v654 = vadd.f32 %v652, %v653
    %v655 = vsel %vm220, %v617, 0.0
    %v656 = vrot.slane %v655, 4
    %v657 = vadd.f32 %v655, %v656
    %v658 = vrot.slane %v657, 2
    %v659 = vadd.f32 %v657, %v658
    %v660 = vrot.slane %v659, 1
    %v661 = vadd.f32 %v659, %v660
    %v662 = vsel %vm220, %v618, 0.0
    %v663 = vrot.slane %v662, 4
    %v664 = vadd.f32 %v662, %v663
    %v665 = vrot.slane %v664, 2
    %v666 = vadd.f32 %v664, %v665
    %v667 = vrot.slane %v666, 1
    %v668 = vadd.f32 %v666, %v667
    %v669 = vsel %vm220, %v619, 0.0
    %v670 = vrot.slane %v669, 4
    %v671 = vadd.f32 %v669, %v670
    %v672 = vrot.slane %v671, 2
    %v673 = vadd.f32 %v671, %v672
    %v674 = vrot.slane %v673, 1
    %v675 = vadd.f32 %v673, %v674
    %v676 = vpack.c.bf16 %v626, %v626
    %v677 = vpack.c.bf16 %v633, %v633
    %v678 = vpack.c.bf16 %v640, %v640
    %v679 = vpack.c.bf16 %v647, %v647
    %v680 = vpack.c.bf16 %v654, %v654
    %v681 = vpack.c.bf16 %v661, %v661
    %v682 = vpack.c.bf16 %v668, %v668
    %v683 = vpack.c.bf16 %v675, %v675
    %v684 = vld [vmem:[%s9] sm:$0xf]
    %v685 = vld [vmem:[%s9 + $0x4] sm:$0xf]
    %v686 = vld [vmem:[%s9 + $0x8] sm:$0xf]
    %v687 = vld [vmem:[%s9 + $0xc] sm:$0xf]
    %v688 = vld [vmem:[%s9 + $0x10] sm:$0xf]
    %v689 = vld [vmem:[%s9 + $0x14] sm:$0xf]
    %v690 = vld [vmem:[%s9 + $0x18] sm:$0xf]
    %v691 = vld [vmem:[%s9 + $0x1c] sm:$0xf]
    %v692 = vld [vmem:[%s10] sm:$0xf]
    %v693 = vld [vmem:[%s10 + $0x4] sm:$0xf]
    %v694 = vld [vmem:[%s10 + $0x8] sm:$0xf]
    %v695 = vld [vmem:[%s10 + $0xc] sm:$0xf]
    %v696 = vld [vmem:[%s10 + $0x10] sm:$0xf]
    %v697 = vld [vmem:[%s10 + $0x14] sm:$0xf]
    %v704 = vunpack.c.l.b16 %v692
    %v705 = vunpack.c.l.b16 %v693
    %v706 = vunpack.c.l.b16 %v694
    %v707 = vunpack.c.l.b16 %v695
    %v708 = vunpack.c.l.b16 %v696
    %v709 = vunpack.c.l.b16 %v697
    %v710 = vpack.c.b16 %v705, %v704
    %v711 = vpack.c.b16 %v707, %v706
    %v712 = vpack.c.b16 %v709, %v708
    %716 = vmatprep.subr.bf16.mxu0 0
    %717 = vmatpush1.bf16.msra.mxu0 0
    %718 = vmatprep.subr.bf16.mxu0 0
    %719 = vmatpush1.bf16.msra.mxu0 0
    %720 = vmatprep.subr.bf16.mxu0 0
    %721 = vmatpush1.bf16.msra.mxu0 0
    %722 = vmatprep.subr.bf16.mxu0 0
    %723 = vmatpush1.bf16.msra.mxu0 0
    %724 = vmatprep.subr.bf16.mxu0 0
    %725 = vmatpush1.bf16.msra.mxu0 0
    %726 = vmatprep.subr.bf16.mxu0 0
    %727 = vmatpush1.bf16.msra.mxu0 %v712
    %728 = vmatprep.subr.bf16.mxu0 0
    %729 = vmatpush1.bf16.msra.mxu0 %v711
    %730 = vmatprep.subr.bf16.mxu0 0
    %731 = vmatpush1.bf16.msra.mxu0 %v710
    %732 = vmatprep.subr.bf16.mxu0 0
    %733 = vmatpush2.bf16.msra.mxu0 0
    %734 = vmatprep.subr.bf16.mxu0 0
    %735 = vmatpush2.bf16.msra.mxu0 0
    %736 = vmatprep.subr.bf16.mxu0 0
    %737 = vmatpush2.bf16.msra.mxu0 0
    %738 = vmatprep.subr.bf16.mxu0 0
    %739 = vmatpush2.bf16.msra.mxu0 0
    %740 = vmatprep.subr.bf16.mxu0 0
    %741 = vmatpush2.bf16.msra.mxu0 0
    %742 = vmatprep.subr.bf16.mxu0 0
    %743 = vmatpush2.bf16.msra.mxu0 0
    %744 = vmatprep.subr.bf16.mxu0 0
    %745 = vmatpush2.bf16.msra.mxu0 0
    %746 = vmatprep.subr.bf16.mxu0 0
    %747 = vmatpush2.bf16.msra.mxu0 0
    %748 = vmatprep.mubr.bf16.mxu0 0
    %749 = vmatmul.mubr.bf16.gmra.mxu0 %v126
    %v750 = vpop.f32.mrf.mxu0
    %v751 = vadd.f32 0.0, %v750
    %v752 = vpop.f32.mrf.mxu0
    %v753 = vpop.f32.mrf.mxu0
    %v754 = vpop.f32.mrf.mxu0
    %755 = vdwg.mxu0
    %v764 = vunpack.c.l.b16 %v676
    %v765 = vunpack.c.l.b16 %v677
    %v766 = vunpack.c.l.b16 %v678
    %v767 = vunpack.c.l.b16 %v679
    %v768 = vunpack.c.l.b16 %v680
    %v769 = vunpack.c.l.b16 %v681
    %v770 = vunpack.c.l.b16 %v682
    %v771 = vunpack.c.l.b16 %v683
    %v772 = vsel %vm520, %v765, %v764
    %v773 = vsel %vm522, %v766, %v772
    %v774 = vsel %vm524, %v767, %v773
    %v775 = vsel %vm526, %v768, %v774
    %v776 = vsel %vm528, %v769, %v775
    %v777 = vsel %vm530, %v770, %v776
    %v778 = vsel %vm532, %v771, %v777
    %v779 = vpack.c.b16 %v778, %v778
    %v788 = vunpack.c.l.b16 %v684
    %v789 = vunpack.c.l.b16 %v685
    %v790 = vunpack.c.l.b16 %v686
    %v791 = vunpack.c.l.b16 %v687
    %v792 = vunpack.c.l.b16 %v688
    %v793 = vunpack.c.l.b16 %v689
    %v794 = vunpack.c.l.b16 %v690
    %v795 = vunpack.c.l.b16 %v691
    %v796 = vpack.c.b16 %v789, %v788
    %v797 = vpack.c.b16 %v791, %v790
    %v798 = vpack.c.b16 %v793, %v792
    %v799 = vpack.c.b16 %v795, %v794
    %v805 = vsel %vm220, %v779, 0
    %807 = vmatprep.subr.bf16.mxu0 0
    %808 = vmatpush1.bf16.msra.mxu0 0
    %809 = vmatprep.subr.bf16.mxu0 0
    %810 = vmatpush1.bf16.msra.mxu0 0
    %811 = vmatprep.subr.bf16.mxu0 0
    %812 = vmatpush1.bf16.msra.mxu0 0
    %813 = vmatprep.subr.bf16.mxu0 0
    %814 = vmatpush1.bf16.msra.mxu0 0
    %815 = vmatprep.subr.bf16.mxu0 0
    %816 = vmatpush1.bf16.msra.mxu0 %v799
    %817 = vmatprep.subr.bf16.mxu0 0
    %818 = vmatpush1.bf16.msra.mxu0 %v798
    %819 = vmatprep.subr.bf16.mxu0 0
    %820 = vmatpush1.bf16.msra.mxu0 %v797
    %821 = vmatprep.subr.bf16.mxu0 0
    %822 = vmatpush1.bf16.msra.mxu0 %v796
    %823 = vmatprep.subr.bf16.mxu0 0
    %824 = vmatpush2.bf16.msra.mxu0 0
    %825 = vmatprep.subr.bf16.mxu0 0
    %826 = vmatpush2.bf16.msra.mxu0 0
    %827 = vmatprep.subr.bf16.mxu0 0
    %828 = vmatpush2.bf16.msra.mxu0 0
    %829 = vmatprep.subr.bf16.mxu0 0
    %830 = vmatpush2.bf16.msra.mxu0 0
    %831 = vmatprep.subr.bf16.mxu0 0
    %832 = vmatpush2.bf16.msra.mxu0 0
    %833 = vmatprep.subr.bf16.mxu0 0
    %834 = vmatpush2.bf16.msra.mxu0 0
    %835 = vmatprep.subr.bf16.mxu0 0
    %836 = vmatpush2.bf16.msra.mxu0 0
    %837 = vmatprep.subr.bf16.mxu0 0
    %838 = vmatpush2.bf16.msra.mxu0 0
    %839 = vmatprep.mubr.bf16.mxu0 0
    %840 = vmatmul.mubr.bf16.gmra.mxu0 %v805
    %v841 = vpop.f32.mrf.mxu0
    %v842 = vadd.f32 %v751, %v841
    %v843 = vpop.f32.mrf.mxu0
    %v844 = vpop.f32.mrf.mxu0
    %v845 = vpop.f32.mrf.mxu0
    %846 = vdwg.mxu0
    %v847 = vld [vmem:[%s11] sm:$0x1]
    %v849 = vlaneseq
    %v850 = vshrl.u32 %v849, 7
    %v851 = vsub.s32 0, %v850
    %v852 = vrot.slane %v847, %v851
    %v854 = vadd.f32 %v842, %v852
    %v855 = vxor.u32 %v854, 2147483648
    %v856 = vmul.f32 %v855, 1.442695
    %v857 = vpow.pop %v856
    %v858 = vadd.f32 %v857, 1.0
    %v859 = vrcp.pop %v858
    %v860 = vmul.f32 1.0, %v859
    %v861 = vtanh.pop %v854
    %863 = vrot.lane.b32.xlu0 %v98, 32
    %v864 = vpop.permute.xlu0 %863
    %v866 = vmul.f32 %v860, %v864
    %868 = vrot.lane.b32.xlu0 %v861, 64
    %v869 = vpop.permute.xlu0 %868
    %v871 = vmul.f32 %v860, %v869
    %873 = vrot.lane.b32.xlu0 %v871, 32
    %v874 = vpop.permute.xlu0 %873
    %v876 = vadd.f32 %v866, %v874
    %v877 = vtanh.pop %v876
    %879 = vrot.lane.b32.xlu0 %v877, 64
    %v880 = vpop.permute.xlu0 %879
    %v882 = vmul.f32 %v860, %v880
    %v883 = vpack.c.bf16 %v882, %v882
    %v884 = vld [vmem:[%s12] sm:$0xf]
    %v885 = vld [vmem:[%s12 + $0x4] sm:$0xf]
    %v886 = vld [vmem:[%s12 + $0x8] sm:$0xf]
    %v887 = vld [vmem:[%s12 + $0xc] sm:$0xf]
    %v888 = vld [vmem:[%s13] sm:$0xf]
    %v889 = vld [vmem:[%s13 + $0x4] sm:$0xf]
    %v890 = vld [vmem:[%s13 + $0x8] sm:$0xf]
    %v891 = vld [vmem:[%s13 + $0xc] sm:$0xf]
    %v892 = vld [vmem:[%s13 + $0x10] sm:$0xf]
    %v893 = vld [vmem:[%s13 + $0x14] sm:$0xf]
    %v894 = vld [vmem:[%s13 + $0x18] sm:$0xf]
    %v895 = vld [vmem:[%s13 + $0x1c] sm:$0xf]
    %v904 = vunpack.c.l.b16 %v888
    %v905 = vunpack.c.l.b16 %v889
    %v906 = vunpack.c.l.b16 %v890
    %v907 = vunpack.c.l.b16 %v891
    %v908 = vunpack.c.l.b16 %v892
    %v909 = vunpack.c.l.b16 %v893
    %v910 = vunpack.c.l.b16 %v894
    %v911 = vunpack.c.l.b16 %v895
    %v912 = vpack.c.b16 %v905, %v904
    %v913 = vpack.c.b16 %v907, %v906
    %v914 = vpack.c.b16 %v909, %v908
    %v915 = vpack.c.b16 %v911, %v910
    %920 = vmatprep.subr.bf16.mxu0 0
    %921 = vmatpush1.bf16.msra.mxu0 0
    %922 = vmatprep.subr.bf16.mxu0 0
    %923 = vmatpush1.bf16.msra.mxu0 0
    %924 = vmatprep.subr.bf16.mxu0 0
    %925 = vmatpush1.bf16.msra.mxu0 0
    %926 = vmatprep.subr.bf16.mxu0 0
    %927 = vmatpush1.bf16.msra.mxu0 0
    %928 = vmatprep.subr.bf16.mxu0 0
    %929 = vmatpush1.bf16.msra.mxu0 %v915
    %930 = vmatprep.subr.bf16.mxu0 0
    %931 = vmatpush1.bf16.msra.mxu0 %v914
    %932 = vmatprep.subr.bf16.mxu0 0
    %933 = vmatpush1.bf16.msra.mxu0 %v913
    %934 = vmatprep.subr.bf16.mxu0 0
    %935 = vmatpush1.bf16.msra.mxu0 %v912
    %936 = vmatprep.subr.bf16.mxu0 0
    %937 = vmatpush2.bf16.msra.mxu0 0
    %938 = vmatprep.subr.bf16.mxu0 0
    %939 = vmatpush2.bf16.msra.mxu0 0
    %940 = vmatprep.subr.bf16.mxu0 0
    %941 = vmatpush2.bf16.msra.mxu0 0
    %942 = vmatprep.subr.bf16.mxu0 0
    %943 = vmatpush2.bf16.msra.mxu0 0
    %944 = vmatprep.subr.bf16.mxu0 0
    %945 = vmatpush2.bf16.msra.mxu0 0
    %946 = vmatprep.subr.bf16.mxu0 0
    %947 = vmatpush2.bf16.msra.mxu0 0
    %948 = vmatprep.subr.bf16.mxu0 0
    %949 = vmatpush2.bf16.msra.mxu0 0
    %950 = vmatprep.subr.bf16.mxu0 0
    %951 = vmatpush2.bf16.msra.mxu0 0
    %952 = vmatprep.mubr.bf16.mxu0 0
    %953 = vmatmul.mubr.bf16.gmra.mxu0 %v805
    %v954 = vpop.f32.mrf.mxu0
    %v955 = vadd.f32 0.0, %v954
    %v956 = vpop.f32.mrf.mxu0
    %v957 = vpop.f32.mrf.mxu0
    %v958 = vpop.f32.mrf.mxu0
    %959 = vdwg.mxu0
    %961 = vrot.lane.b32.xlu0 %v883, 32
    %v962 = vpop.permute.xlu0 %961
    %v967 = vunpack.c.l.b16 %v884
    %v968 = vunpack.c.l.b16 %v885
    %v969 = vunpack.c.l.b16 %v886
    %v970 = vunpack.c.l.b16 %v887
    %v971 = vpack.c.b16 %v968, %v967
    %v972 = vpack.c.b16 %v970, %v969
    %v976 = vsel %vm434, %v962, 0
    %978 = vmatprep.subr.bf16.mxu0 0
    %979 = vmatpush1.bf16.msra.mxu0 0
    %980 = vmatprep.subr.bf16.mxu0 0
    %981 = vmatpush1.bf16.msra.mxu0 0
    %982 = vmatprep.subr.bf16.mxu0 0
    %983 = vmatpush1.bf16.msra.mxu0 0
    %984 = vmatprep.subr.bf16.mxu0 0
    %985 = vmatpush1.bf16.msra.mxu0 0
    %986 = vmatprep.subr.bf16.mxu0 0
    %987 = vmatpush1.bf16.msra.mxu0 0
    %988 = vmatprep.subr.bf16.mxu0 0
    %989 = vmatpush1.bf16.msra.mxu0 0
    %990 = vmatprep.subr.bf16.mxu0 0
    %991 = vmatpush1.bf16.msra.mxu0 %v972
    %992 = vmatprep.subr.bf16.mxu0 0
    %993 = vmatpush1.bf16.msra.mxu0 %v971
    %994 = vmatprep.subr.bf16.mxu0 0
    %995 = vmatpush2.bf16.msra.mxu0 0
    %996 = vmatprep.subr.bf16.mxu0 0
    %997 = vmatpush2.bf16.msra.mxu0 0
    %998 = vmatprep.subr.bf16.mxu0 0
    %999 = vmatpush2.bf16.msra.mxu0 0
    %1000 = vmatprep.subr.bf16.mxu0 0
    %1001 = vmatpush2.bf16.msra.mxu0 0
    %1002 = vmatprep.subr.bf16.mxu0 0
    %1003 = vmatpush2.bf16.msra.mxu0 0
    %1004 = vmatprep.subr.bf16.mxu0 0
    %1005 = vmatpush2.bf16.msra.mxu0 0
    %1006 = vmatprep.subr.bf16.mxu0 0
    %1007 = vmatpush2.bf16.msra.mxu0 0
    %1008 = vmatprep.subr.bf16.mxu0 0
    %1009 = vmatpush2.bf16.msra.mxu0 0
    %1010 = vmatprep.mubr.bf16.mxu0 0
    %1011 = vmatmul.mubr.bf16.gmra.mxu0 %v976
    %v1012 = vpop.f32.mrf.mxu0
    %v1013 = vadd.f32 %v955, %v1012
    %v1014 = vpop.f32.mrf.mxu0
    %v1015 = vpop.f32.mrf.mxu0
    %v1016 = vpop.f32.mrf.mxu0
    %1017 = vdwg.mxu0
    %v1018 = vld [vmem:[%s14] sm:$0x1]
    %v1020 = vlaneseq
    %v1021 = vshrl.u32 %v1020, 7
    %v1022 = vsub.s32 0, %v1021
    %v1023 = vrot.slane %v1018, %v1022
    %v1025 = vadd.f32 %v1013, %v1023
    %1027 = vrot.lane.b32.xlu0 %v882, 64
    %v1028 = vpop.permute.xlu0 %1027
    %1031 = vrot.lane.b32.xlu0 %v876, 32
    %v1032 = vpop.permute.xlu0 %1031
    %v1034 = vsel %vm434, %v1025, %v1028
    %v1035 = vsel %vm220, %v1034, %v1032
    %vm1036 = vcmask 785408
    %1037 = vst.msk [vmem:[#allocation9] sm:$0xff] %vm1036, %v1035
    // Predicated region
    $region74: #{tpu_custom_call.1} parent=1 // pred_check
      _
    $region75: #{tpu_custom_call.1} parent=1 // pred_check_branch
      %1039 = sbr.rel (0) target = $region77
    $region76: #{tpu_custom_call.1} parent=1 // pred_region
      %s1041 = ssub.s32 128, 128
      %1042 = vsyncadd [#allocation5], %s1041
      %s1044 = sshll.u32 [#allocation9], 4
      %s1045 = int_to_ptr.vmem [resolvable:$true] %s1044
      %1047 = dma.vmem_to_hbm [thread:$0]  %s1045, 128, %s15, [#allocation5]
    $region77: #{tpu_custom_call.1} parent=1 // pred_fallthru
      _
    // Predicated region
    $region78: #{tpu_custom_call.1} parent=1 // pred_check
      _
    $region79: #{tpu_custom_call.1} parent=1 // pred_check_branch
      %1049 = sbr.rel (0) target = $region81
    $region80: #{tpu_custom_call.1} parent=1 // pred_region
      %1050 = dma.done [#allocation5], 128
    $region81: #{tpu_custom_call.1} parent=1 // pred_fallthru
      _
    %1051 = vsyncpa [#allocation4], 1
    %1052 = vsyncpa [#allocation7], 1
    %1053 = vsyncpa [#allocation5], 1

</llo_original>
